<compile_context>
chip_gen: v5e
topology: v5e:2x2
jax: 0.10.0
libtpu: 0.0.40
codegen_flags: <defaults>
</compile_context>

<pallas_src>
import jax
import jax.numpy as jnp
from jax import lax
from jax.experimental import pallas as pl
from jax.experimental.pallas import tpu as pltpu


def conv_relu_pool_kernel(p_ref, w_ref, b_ref, o_ref):
    """Fused conv(as one GEMM) + 2x2/2 max-pool + bias + ReLU for the whole batch.

    p_ref: (4*G, K)   im2col patches; row = s*G + n*Mp + m, s = pool offset dh*2+dw
    w_ref: (K, 128)   conv weight in GEMM form (Cin*KH*KW, Cout padded to 128 lanes)
    b_ref: (1, 128)   conv bias (padded to 128 lanes)
    o_ref: (G, 128)   pooled output rows, G = N*Mp (Mp = Hp*Wp padded to sublane mult.)
    """
    g = o_ref.shape[0]
    # Single MXU matmul for all batch elements and all 4 pool-window offsets.
    y = jnp.dot(p_ref[...], w_ref[...], preferred_element_type=jnp.float32)
    # 2x2 max-pool = max over the 4 offset groups (static, sublane-aligned slices).
    m01 = jnp.maximum(y[0 * g:1 * g], y[1 * g:2 * g])
    m23 = jnp.maximum(y[2 * g:3 * g], y[3 * g:4 * g])
    pooled = jnp.maximum(m01, m23)
    # Bias + ReLU hoisted after the max (bias shared across branches; ReLU monotone).
    o_ref[...] = jnp.maximum(pooled + b_ref[...], 0.0).astype(o_ref.dtype)


@jax.jit
def convnet_forward(x_nchw, w_oihw, bias):
    n, cin, h, w = x_nchw.shape
    cout, cin_w, kh, kw = w_oihw.shape
    assert cin == cin_w
    hout, wout = h - kh + 1, w - kw + 1          # VALID conv
    hp, wp = hout // 2, wout // 2                # floor-mode 2x2/2 pool
    m = hp * wp
    k = cin * kh * kw
    mp = ((m + 7) // 8) * 8                      # pad rows to sublane multiple (49 -> 56)
    cout_pad = ((cout + 127) // 128) * 128       # lane-dense output (10 -> 128)
    g = n * mp                                   # GEMM rows per pool branch

    x_nhwc = jnp.transpose(x_nchw, (0, 2, 3, 1)).astype(jnp.float32)

    # One fused XLA im2col: (N, Hout, Wout, Cin*KH*KW); feature order is (c, kh, kw).
    pats = lax.conv_general_dilated_patches(
        x_nhwc, filter_shape=(kh, kw), window_strides=(1, 1), padding="VALID",
        dimension_numbers=("NHWC", "HWIO", "NHWC"))

    # Group by 2x2 pool offset s = dh*2 + dw (4 strided slices), pad M, flatten.
    groups = [
        pats[:, dh:dh + 2 * hp:2, dw:dw + 2 * wp:2, :].reshape(n, m, k)
        for dh in range(2) for dw in range(2)
    ]
    pgrp = jnp.stack(groups, axis=0)                              # (4, N, M, K)
    pgrp = jnp.pad(pgrp, ((0, 0), (0, 0), (0, mp - m), (0, 0)))   # (4, N, Mp, K)
    patches = pgrp.reshape(4 * g, k)                              # row = s*G + n*Mp + m

    # Weight (OIHW) -> GEMM form with matching (c, kh, kw) row order; pad lanes to 128.
    w_gemm = jnp.transpose(w_oihw.reshape(cout, k)).astype(jnp.float32)   # (K, Cout)
    w_gemm = jnp.pad(w_gemm, ((0, 0), (0, cout_pad - cout)))
    b_gemm = jnp.pad(bias.astype(jnp.float32), (0, cout_pad - cout)).reshape(1, cout_pad)

    # Single grid step: whole problem resident in VMEM (a few hundred KB at most).
    # TODO(synk): if N grows large, reintroduce a "parallel" batch grid axis so v7x's
    # second TensorCore is used and per-step VMEM stays within 64 MiB.
    out = pl.pallas_call(
        conv_relu_pool_kernel,
        out_shape=jax.ShapeDtypeStruct((g, cout_pad), jnp.float32),
        in_specs=[
            pl.BlockSpec(memory_space=pltpu.MemorySpace.VMEM),
            pl.BlockSpec(memory_space=pltpu.MemorySpace.VMEM),
            pl.BlockSpec(memory_space=pltpu.MemorySpace.VMEM),
        ],
        out_specs=pl.BlockSpec(memory_space=pltpu.MemorySpace.VMEM),
    )(patches, w_gemm, b_gemm)

    out = out.reshape(n, mp, cout_pad)[:, :m, :cout]      # drop row/lane padding
    out = out.reshape(n, hp, wp, cout)
    return jnp.transpose(out, (0, 3, 1, 2))               # back to NCHW


def reference_forward(x_nchw, w_oihw, bias):
    """Plain-JAX reference matching torch semantics (NCHW, VALID conv, floor pool)."""
    y = lax.conv_general_dilated(
        x_nchw, w_oihw, window_strides=(1, 1), padding="VALID",
        dimension_numbers=("NCHW", "OIHW", "NCHW"),
        precision=lax.Precision.HIGHEST)
    y = y + bias.reshape(1, -1, 1, 1)
    y = jnp.maximum(y, 0.0)
    y = lax.reduce_window(y, -jnp.inf, lax.max,
                          window_dimensions=(1, 1, 2, 2),
                          window_strides=(1, 1, 2, 2), padding="VALID")
    return y


if __name__ == "__main__":
    key = jax.random.PRNGKey(0)
    kx, kw_key, kb_key = jax.random.split(key, 3)

    # Input: batch=2, channels=3 (Conv2d expects 3 in-channels), 16x16 spatial.
    x = jax.random.normal(kx, (2, 3, 16, 16), dtype=jnp.float32)

    # Conv2d(3, 10, kernel_size=3): weight (10, 3, 3, 3) OIHW, bias (10,),
    # deterministic uniform init mimicking PyTorch's default bound 1/sqrt(fan_in).
    fan_in = 3 * 3 * 3
    bound = 1.0 / (fan_in ** 0.5)
    w = jax.random.uniform(kw_key, (10, 3, 3, 3), jnp.float32, -bound, bound)
    b = jax.random.uniform(kb_key, (10,), jnp.float32, -bound, bound)

    out = jax.block_until_ready(convnet_forward(x, w, b))
    ref = jax.block_until_ready(reference_forward(x, w, b))

    assert out.shape == (2, 10, 7, 7), out.shape
    assert jnp.allclose(out, ref, atol=1e-3, rtol=1e-3), \
        float(jnp.max(jnp.abs(out - ref)))
    print("KERNEL_OK")
</pallas_src>

<mosaic_0001>
module attributes {stable_mosaic.version = 11 : i64} {
  func.func @conv_relu_pool_kernel(%arg0: memref<448x27xf32, #tpu.memory_space<vmem>>, %arg1: memref<27x128xf32, #tpu.memory_space<vmem>>, %arg2: memref<1x128xf32, #tpu.memory_space<vmem>>, %arg3: memref<112x128xf32, #tpu.memory_space<vmem>>) attributes {dimension_semantics = [], scalar_prefetch = 0 : i64, scratch_operands = 0 : i64, tpu.core_type = #tpu.core_type<tc>} {
    %c0 = arith.constant 0 : index
    %c0_0 = arith.constant 0 : index
    %0 = vector.load %arg0[%c0, %c0_0] : memref<448x27xf32, #tpu.memory_space<vmem>>, vector<448x27xf32>
    %c0_1 = arith.constant 0 : index
    %c0_2 = arith.constant 0 : index
    %1 = vector.load %arg1[%c0_1, %c0_2] : memref<27x128xf32, #tpu.memory_space<vmem>>, vector<27x128xf32>
    %cst = arith.constant dense<0.000000e+00> : vector<448x128xf32>
    %2 = tpu.matmul %0, %1, %cst {dimension_numbers = #tpu.dot_dimension_numbers<[1], [0], [0], [1], [0, 0, 1, 1], [], []>} : vector<448x27xf32>, vector<27x128xf32>, vector<448x128xf32> -> vector<448x128xf32>
    %3 = vector.extract_strided_slice %2 {offsets = [0, 0], sizes = [112, 128], strides = [1, 1]} : vector<448x128xf32> to vector<112x128xf32>
    %4 = vector.extract_strided_slice %2 {offsets = [112, 0], sizes = [112, 128], strides = [1, 1]} : vector<448x128xf32> to vector<112x128xf32>
    %5 = arith.maximumf %3, %4 : vector<112x128xf32>
    %6 = vector.extract_strided_slice %2 {offsets = [224, 0], sizes = [112, 128], strides = [1, 1]} : vector<448x128xf32> to vector<112x128xf32>
    %7 = vector.extract_strided_slice %2 {offsets = [336, 0], sizes = [112, 128], strides = [1, 1]} : vector<448x128xf32> to vector<112x128xf32>
    %8 = arith.maximumf %6, %7 : vector<112x128xf32>
    %9 = arith.maximumf %5, %8 : vector<112x128xf32>
    %c0_3 = arith.constant 0 : index
    %c0_4 = arith.constant 0 : index
    %10 = vector.load %arg2[%c0_3, %c0_4] : memref<1x128xf32, #tpu.memory_space<vmem>>, vector<1x128xf32>
    %11 = vector.broadcast %10 : vector<1x128xf32> to vector<112x128xf32>
    %12 = arith.addf %9, %11 : vector<112x128xf32>
    %cst_5 = arith.constant 0.000000e+00 : f32
    %13 = vector.broadcast %cst_5 : f32 to vector<112x128xf32>
    %14 = arith.maximumf %12, %13 : vector<112x128xf32>
    %c0_6 = arith.constant 0 : index
    %c0_7 = arith.constant 0 : index
    %15 = vector.load %arg3[%c0_6, %c0_7] : memref<112x128xf32, #tpu.memory_space<vmem>>, vector<112x128xf32>
    tpu.vector_store %arg3[%c0_6, %c0_7], %14 {strides = array<i32>} : memref<112x128xf32, #tpu.memory_space<vmem>>, vector<112x128xf32>,
    return
  }
}

</mosaic_0001>

<llo_original>
// kernel: convnet_forward.1
$region0: #{convnet_forward.1}
  #allocation0 [shape = 'u32[]', space=smem, size = 0x4, offset = 0x4, fixed_abs, tag = 'smem constant byte address 0x4 - core index']
  #allocation1 [shape = 'u32[72,128]{1,0:T(1,128)}', space=vmem, size = 0x9000, scoped, tag = 'internal scratch']
  %s0 = inlined_call_operand.vmem [shape: f32[448,27], index: 0, kind: input, shape index: {}]
  %s1 = inlined_call_operand.vmem [shape: f32[27,128], index: 1, kind: input, shape index: {}]
  %s2 = inlined_call_operand.vmem [shape: f32[1,128], index: 2, kind: input, shape index: {}]
  %s3 = inlined_call_operand.vmem [shape: f32[112,128], index: 3, kind: output, shape index: {}]
  %s4 = sld [smem:[#allocation0]]
  $region22: #{convnet_forward.1} parent=0
    _
  %s6 = ssub.s32 1, %s4
  %s7 = scalar_select 0, %s6, %s4
  // Predicated region
  $region2: #{convnet_forward.1} parent=0 // pred_check
    _
  $region3: #{convnet_forward.1} parent=0 // pred_check_branch
    %9 = sbr.rel (0) target = $region5
  $region4: #{convnet_forward.1} parent=0 // pred_region
    _
  $region5: #{convnet_forward.1} parent=0 // pred_fallthru
    _
  // Predicated region
  $region6: #{convnet_forward.1} parent=0 // pred_check
    _
  $region7: #{convnet_forward.1} parent=0 // pred_check_branch
    %11 = sbr.rel (0) target = $region9
  $region8: #{convnet_forward.1} parent=0 // pred_region
    _
  $region9: #{convnet_forward.1} parent=0 // pred_fallthru
    _
  // Predicated region
  $region10: #{convnet_forward.1} parent=0 // pred_check
    _
  $region11: #{convnet_forward.1} parent=0 // pred_check_branch
    %13 = sbr.rel (0) target = $region13
  $region12: #{convnet_forward.1} parent=0 // pred_region
    _
  $region13: #{convnet_forward.1} parent=0 // pred_fallthru
    _
  %v14 = vld [vmem:[%s0] sm:$0xff]
  %v15 = vld [vmem:[%s0 + $0x8] sm:$0xff]
  %v16 = vld [vmem:[%s0 + $0x10] sm:$0xff]
  %v17 = vld [vmem:[%s0 + $0x18] sm:$0xff]
  %v18 = vld [vmem:[%s0 + $0x20] sm:$0xff]
  %v19 = vld [vmem:[%s0 + $0x28] sm:$0xff]
  %v20 = vld [vmem:[%s0 + $0x30] sm:$0xff]
  %v21 = vld [vmem:[%s0 + $0x38] sm:$0xff]
  %v22 = vld [vmem:[%s0 + $0x40] sm:$0xff]
  %v23 = vld [vmem:[%s0 + $0x48] sm:$0xff]
  %v24 = vld [vmem:[%s0 + $0x50] sm:$0xff]
  %v25 = vld [vmem:[%s0 + $0x58] sm:$0xff]
  %v26 = vld [vmem:[%s0 + $0x60] sm:$0xff]
  %v27 = vld [vmem:[%s0 + $0x68] sm:$0xff]
  %v28 = vld [vmem:[%s0 + $0x70] sm:$0xff]
  %v29 = vld [vmem:[%s0 + $0x78] sm:$0xff]
  %v30 = vld [vmem:[%s0 + $0x80] sm:$0xff]
  %v31 = vld [vmem:[%s0 + $0x88] sm:$0xff]
  %v32 = vld [vmem:[%s0 + $0x90] sm:$0xff]
  %v33 = vld [vmem:[%s0 + $0x98] sm:$0xff]
  %v34 = vld [vmem:[%s0 + $0xa0] sm:$0xff]
  %v35 = vld [vmem:[%s0 + $0xa8] sm:$0xff]
  %v36 = vld [vmem:[%s0 + $0xb0] sm:$0xff]
  %v37 = vld [vmem:[%s0 + $0xb8] sm:$0xff]
  %v38 = vld [vmem:[%s0 + $0xc0] sm:$0xff]
  %v39 = vld [vmem:[%s0 + $0xc8] sm:$0xff]
  %v40 = vld [vmem:[%s0 + $0xd0] sm:$0xff]
  %v41 = vld [vmem:[%s0 + $0xd8] sm:$0xff]
  %v42 = vld [vmem:[%s0 + $0xe0] sm:$0xff]
  %v43 = vld [vmem:[%s0 + $0xe8] sm:$0xff]
  %v44 = vld [vmem:[%s0 + $0xf0] sm:$0xff]
  %v45 = vld [vmem:[%s0 + $0xf8] sm:$0xff]
  %v46 = vld [vmem:[%s0 + $0x100] sm:$0xff]
  %v47 = vld [vmem:[%s0 + $0x108] sm:$0xff]
  %v48 = vld [vmem:[%s0 + $0x110] sm:$0xff]
  %v49 = vld [vmem:[%s0 + $0x118] sm:$0xff]
  %v50 = vld [vmem:[%s0 + $0x120] sm:$0xff]
  %v51 = vld [vmem:[%s0 + $0x128] sm:$0xff]
  %v52 = vld [vmem:[%s0 + $0x130] sm:$0xff]
  %v53 = vld [vmem:[%s0 + $0x138] sm:$0xff]
  %v54 = vld [vmem:[%s0 + $0x140] sm:$0xff]
  %v55 = vld [vmem:[%s0 + $0x148] sm:$0xff]
  %v56 = vld [vmem:[%s0 + $0x150] sm:$0xff]
  %v57 = vld [vmem:[%s0 + $0x158] sm:$0xff]
  %v58 = vld [vmem:[%s0 + $0x160] sm:$0xff]
  %v59 = vld [vmem:[%s0 + $0x168] sm:$0xff]
  %v60 = vld [vmem:[%s0 + $0x170] sm:$0xff]
  %v61 = vld [vmem:[%s0 + $0x178] sm:$0xff]
  %v62 = vld [vmem:[%s0 + $0x180] sm:$0xff]
  %v63 = vld [vmem:[%s0 + $0x188] sm:$0xff]
  %v64 = vld [vmem:[%s0 + $0x190] sm:$0xff]
  %v65 = vld [vmem:[%s0 + $0x198] sm:$0xff]
  %v66 = vld [vmem:[%s0 + $0x1a0] sm:$0xff]
  %v67 = vld [vmem:[%s0 + $0x1a8] sm:$0xff]
  %v68 = vld [vmem:[%s0 + $0x1b0] sm:$0xff]
  %v69 = vld [vmem:[%s0 + $0x1b8] sm:$0xff]
  %v70 = vld [vmem:[%s1] sm:$0xff]
  %v71 = vld [vmem:[%s1 + $0x8] sm:$0xff]
  %v72 = vld [vmem:[%s1 + $0x10] sm:$0xff]
  %v73 = vld [vmem:[%s1 + $0x18] sm:$0x7]
  %vm74 = vcmask 220160
  %v76 = vsel %vm74, %v14, 0
  %v79 = vsel %vm74, %v15, 0
  %v82 = vsel %vm74, %v16, 0
  %v85 = vsel %vm74, %v17, 0
  %v88 = vsel %vm74, %v18, 0
  %v91 = vsel %vm74, %v19, 0
  %v94 = vsel %vm74, %v20, 0
  %v97 = vsel %vm74, %v21, 0
  %v100 = vsel %vm74, %v22, 0
  %v103 = vsel %vm74, %v23, 0
  %v106 = vsel %vm74, %v24, 0
  %v109 = vsel %vm74, %v25, 0
  %v112 = vsel %vm74, %v26, 0
  %v115 = vsel %vm74, %v27, 0
  %v118 = vsel %vm74, %v28, 0
  %v121 = vsel %vm74, %v29, 0
  %v124 = vsel %vm74, %v30, 0
  %v127 = vsel %vm74, %v31, 0
  %v130 = vsel %vm74, %v32, 0
  %v133 = vsel %vm74, %v33, 0
  %v136 = vsel %vm74, %v34, 0
  %v139 = vsel %vm74, %v35, 0
  %v142 = vsel %vm74, %v36, 0
  %v145 = vsel %vm74, %v37, 0
  %v148 = vsel %vm74, %v38, 0
  %v151 = vsel %vm74, %v39, 0
  %v154 = vsel %vm74, %v40, 0
  %v157 = vsel %vm74, %v41, 0
  %v160 = vsel %vm74, %v42, 0
  %v163 = vsel %vm74, %v43, 0
  %v166 = vsel %vm74, %v44, 0
  %v169 = vsel %vm74, %v45, 0
  %v172 = vsel %vm74, %v46, 0
  %v175 = vsel %vm74, %v47, 0
  %v178 = vsel %vm74, %v48, 0
  %v181 = vsel %vm74, %v49, 0
  %v184 = vsel %vm74, %v50, 0
  %v187 = vsel %vm74, %v51, 0
  %v190 = vsel %vm74, %v52, 0
  %v193 = vsel %vm74, %v53, 0
  %v196 = vsel %vm74, %v54, 0
  %v199 = vsel %vm74, %v55, 0
  %v202 = vsel %vm74, %v56, 0
  %v205 = vsel %vm74, %v57, 0
  %v208 = vsel %vm74, %v58, 0
  %v211 = vsel %vm74, %v59, 0
  %v214 = vsel %vm74, %v60, 0
  %v217 = vsel %vm74, %v61, 0
  %v220 = vsel %vm74, %v62, 0
  %v223 = vsel %vm74, %v63, 0
  %v226 = vsel %vm74, %v64, 0
  %v229 = vsel %vm74, %v65, 0
  %v232 = vsel %vm74, %v66, 0
  %v235 = vsel %vm74, %v67, 0
  %v238 = vsel %vm74, %v68, 0
  %v241 = vsel %vm74, %v69, 0
  %vm243 = vcmask 1042432
  %v245 = vsel %vm243, %v73, 0
  %247 = vmatpush.msra.mxu0 0.0
  %248 = vmatpush.msra.mxu0 0.0
  %249 = vmatpush.msra.mxu0 0.0
  %250 = vmatpush.msra.mxu0 0.0
  %251 = vmatpush.msra.mxu0 0.0
  %252 = vmatpush.msra.mxu0 0.0
  %253 = vmatpush.msra.mxu0 0.0
  %254 = vmatpush.msra.mxu0 0.0
  %255 = vmatpush.msra.mxu0 0.0
  %256 = vmatpush.msra.mxu0 0.0
  %257 = vmatpush.msra.mxu0 0.0
  %258 = vmatpush.msra.mxu0 0.0
  %259 = vmatpush.msra.mxu0 %v245
  %260 = vmatpush.msra.mxu0 %v72
  %261 = vmatpush.msra.mxu0 %v71
  %262 = vmatpush.msra.mxu0 %v70
  %263 = vmatmul.f32.gmra.mxu0 %v76
  %v264 = vpop.f32.mrf.mxu0
  %v265 = vadd.f32 0.0, %v264
  %266 = vmatmul.f32.gmra.mxu0 %v79
  %v267 = vpop.f32.mrf.mxu0
  %v268 = vadd.f32 0.0, %v267
  %269 = vmatmul.f32.gmra.mxu0 %v82
  %v270 = vpop.f32.mrf.mxu0
  %v271 = vadd.f32 0.0, %v270
  %272 = vmatmul.f32.gmra.mxu0 %v85
  %v273 = vpop.f32.mrf.mxu0
  %v274 = vadd.f32 0.0, %v273
  %275 = vmatmul.f32.gmra.mxu0 %v88
  %v276 = vpop.f32.mrf.mxu0
  %v277 = vadd.f32 0.0, %v276
  %278 = vmatmul.f32.gmra.mxu0 %v91
  %v279 = vpop.f32.mrf.mxu0
  %v280 = vadd.f32 0.0, %v279
  %281 = vmatmul.f32.gmra.mxu0 %v94
  %v282 = vpop.f32.mrf.mxu0
  %v283 = vadd.f32 0.0, %v282
  %284 = vmatmul.f32.gmra.mxu0 %v97
  %v285 = vpop.f32.mrf.mxu0
  %v286 = vadd.f32 0.0, %v285
  %287 = vmatmul.f32.gmra.mxu0 %v100
  %v288 = vpop.f32.mrf.mxu0
  %v289 = vadd.f32 0.0, %v288
  %290 = vmatmul.f32.gmra.mxu0 %v103
  %v291 = vpop.f32.mrf.mxu0
  %v292 = vadd.f32 0.0, %v291
  %293 = vmatmul.f32.gmra.mxu0 %v106
  %v294 = vpop.f32.mrf.mxu0
  %v295 = vadd.f32 0.0, %v294
  %296 = vmatmul.f32.gmra.mxu0 %v109
  %v297 = vpop.f32.mrf.mxu0
  %v298 = vadd.f32 0.0, %v297
  %299 = vmatmul.f32.gmra.mxu0 %v112
  %v300 = vpop.f32.mrf.mxu0
  %v301 = vadd.f32 0.0, %v300
  %302 = vmatmul.f32.gmra.mxu0 %v115
  %v303 = vpop.f32.mrf.mxu0
  %v304 = vadd.f32 0.0, %v303
  %305 = vmatmul.f32.gmra.mxu0 %v118
  %v306 = vpop.f32.mrf.mxu0
  %v307 = vadd.f32 0.0, %v306
  %308 = vmatmul.f32.gmra.mxu0 %v121
  %v309 = vpop.f32.mrf.mxu0
  %v310 = vadd.f32 0.0, %v309
  %311 = vmatmul.f32.gmra.mxu0 %v124
  %v312 = vpop.f32.mrf.mxu0
  %v313 = vadd.f32 0.0, %v312
  %314 = vmatmul.f32.gmra.mxu0 %v127
  %v315 = vpop.f32.mrf.mxu0
  %v316 = vadd.f32 0.0, %v315
  %317 = vmatmul.f32.gmra.mxu0 %v130
  %v318 = vpop.f32.mrf.mxu0
  %v319 = vadd.f32 0.0, %v318
  %320 = vmatmul.f32.gmra.mxu0 %v133
  %v321 = vpop.f32.mrf.mxu0
  %v322 = vadd.f32 0.0, %v321
  %323 = vmatmul.f32.gmra.mxu0 %v136
  %v324 = vpop.f32.mrf.mxu0
  %v325 = vadd.f32 0.0, %v324
  %326 = vmatmul.f32.gmra.mxu0 %v139
  %v327 = vpop.f32.mrf.mxu0
  %v328 = vadd.f32 0.0, %v327
  %329 = vmatmul.f32.gmra.mxu0 %v142
  %v330 = vpop.f32.mrf.mxu0
  %v331 = vadd.f32 0.0, %v330
  %332 = vmatmul.f32.gmra.mxu0 %v145
  %v333 = vpop.f32.mrf.mxu0
  %v334 = vadd.f32 0.0, %v333
  %335 = vmatmul.f32.gmra.mxu0 %v148
  %v336 = vpop.f32.mrf.mxu0
  %v337 = vadd.f32 0.0, %v336
  %338 = vmatmul.f32.gmra.mxu0 %v151
  %v339 = vpop.f32.mrf.mxu0
  %v340 = vadd.f32 0.0, %v339
  %341 = vmatmul.f32.gmra.mxu0 %v154
  %v342 = vpop.f32.mrf.mxu0
  %v343 = vadd.f32 0.0, %v342
  %344 = vmatmul.f32.gmra.mxu0 %v157
  %v345 = vpop.f32.mrf.mxu0
  %v346 = vadd.f32 0.0, %v345
  %347 = vmatmul.f32.gmra.mxu0 %v160
  %v348 = vpop.f32.mrf.mxu0
  %v349 = vadd.f32 0.0, %v348
  %350 = vmatmul.f32.gmra.mxu0 %v163
  %v351 = vpop.f32.mrf.mxu0
  %v352 = vadd.f32 0.0, %v351
  %353 = vmatmul.f32.gmra.mxu0 %v166
  %v354 = vpop.f32.mrf.mxu0
  %v355 = vadd.f32 0.0, %v354
  %356 = vmatmul.f32.gmra.mxu0 %v169
  %v357 = vpop.f32.mrf.mxu0
  %v358 = vadd.f32 0.0, %v357
  %359 = vmatmul.f32.gmra.mxu0 %v172
  %v360 = vpop.f32.mrf.mxu0
  %v361 = vadd.f32 0.0, %v360
  %362 = vmatmul.f32.gmra.mxu0 %v175
  %v363 = vpop.f32.mrf.mxu0
  %v364 = vadd.f32 0.0, %v363
  %365 = vmatmul.f32.gmra.mxu0 %v178
  %v366 = vpop.f32.mrf.mxu0
  %v367 = vadd.f32 0.0, %v366
  %368 = vmatmul.f32.gmra.mxu0 %v181
  %v369 = vpop.f32.mrf.mxu0
  %v370 = vadd.f32 0.0, %v369
  %371 = vmatmul.f32.gmra.mxu0 %v184
  %v372 = vpop.f32.mrf.mxu0
  %v373 = vadd.f32 0.0, %v372
  %374 = vmatmul.f32.gmra.mxu0 %v187
  %v375 = vpop.f32.mrf.mxu0
  %v376 = vadd.f32 0.0, %v375
  %377 = vmatmul.f32.gmra.mxu0 %v190
  %v378 = vpop.f32.mrf.mxu0
  %v379 = vadd.f32 0.0, %v378
  %380 = vmatmul.f32.gmra.mxu0 %v193
  %v381 = vpop.f32.mrf.mxu0
  %v382 = vadd.f32 0.0, %v381
  %383 = vmatmul.f32.gmra.mxu0 %v196
  %v384 = vpop.f32.mrf.mxu0
  %v385 = vadd.f32 0.0, %v384
  %386 = vmatmul.f32.gmra.mxu0 %v199
  %v387 = vpop.f32.mrf.mxu0
  %v388 = vadd.f32 0.0, %v387
  %389 = vmatmul.f32.gmra.mxu0 %v202
  %v390 = vpop.f32.mrf.mxu0
  %v391 = vadd.f32 0.0, %v390
  %392 = vmatmul.f32.gmra.mxu0 %v205
  %v393 = vpop.f32.mrf.mxu0
  %v394 = vadd.f32 0.0, %v393
  %395 = vmatmul.f32.gmra.mxu0 %v208
  %v396 = vpop.f32.mrf.mxu0
  %v397 = vadd.f32 0.0, %v396
  %398 = vmatmul.f32.gmra.mxu0 %v211
  %v399 = vpop.f32.mrf.mxu0
  %v400 = vadd.f32 0.0, %v399
  %401 = vmatmul.f32.gmra.mxu0 %v214
  %v402 = vpop.f32.mrf.mxu0
  %v403 = vadd.f32 0.0, %v402
  %404 = vmatmul.f32.gmra.mxu0 %v217
  %v405 = vpop.f32.mrf.mxu0
  %v406 = vadd.f32 0.0, %v405
  %407 = vmatmul.f32.gmra.mxu0 %v220
  %v408 = vpop.f32.mrf.mxu0
  %v409 = vadd.f32 0.0, %v408
  %410 = vmatmul.f32.gmra.mxu0 %v223
  %v411 = vpop.f32.mrf.mxu0
  %v412 = vadd.f32 0.0, %v411
  %413 = vmatmul.f32.gmra.mxu0 %v226
  %v414 = vpop.f32.mrf.mxu0
  %v415 = vadd.f32 0.0, %v414
  %416 = vmatmul.f32.gmra.mxu0 %v229
  %v417 = vpop.f32.mrf.mxu0
  %v418 = vadd.f32 0.0, %v417
  %419 = vmatmul.f32.gmra.mxu0 %v232
  %v420 = vpop.f32.mrf.mxu0
  %v421 = vadd.f32 0.0, %v420
  %422 = vmatmul.f32.gmra.mxu0 %v235
  %v423 = vpop.f32.mrf.mxu0
  %v424 = vadd.f32 0.0, %v423
  %425 = vmatmul.f32.gmra.mxu0 %v238
  %v426 = vpop.f32.mrf.mxu0
  %v427 = vadd.f32 0.0, %v426
  %428 = vmatmul.f32.gmra.mxu0 %v241
  %v429 = vpop.f32.mrf.mxu0
  %v430 = vadd.f32 0.0, %v429
  %431 = vdwg.mxu0
  %v432 = vmax.f32 %v265, %v307
  %v433 = vmax.f32 %v268, %v310
  %v434 = vmax.f32 %v271, %v313
  %v435 = vmax.f32 %v274, %v316
  %v436 = vmax.f32 %v277, %v319
  %v437 = vmax.f32 %v280, %v322
  %v438 = vmax.f32 %v283, %v325
  %v439 = vmax.f32 %v286, %v328
  %v440 = vmax.f32 %v289, %v331
  %v441 = vmax.f32 %v292, %v334
  %v442 = vmax.f32 %v295, %v337
  %v443 = vmax.f32 %v298, %v340
  %v444 = vmax.f32 %v301, %v343
  %v445 = vmax.f32 %v304, %v346
  %v446 = vmax.f32 %v349, %v391
  %v447 = vmax.f32 %v352, %v394
  %v448 = vmax.f32 %v355, %v397
  %v449 = vmax.f32 %v358, %v400
  %v450 = vmax.f32 %v361, %v403
  %v451 = vmax.f32 %v364, %v406
  %v452 = vmax.f32 %v367, %v409
  %v453 = vmax.f32 %v370, %v412
  %v454 = vmax.f32 %v373, %v415
  %v455 = vmax.f32 %v376, %v418
  %v456 = vmax.f32 %v379, %v421
  %v457 = vmax.f32 %v382, %v424
  %v458 = vmax.f32 %v385, %v427
  %v459 = vmax.f32 %v388, %v430
  %v460 = vmax.f32 %v432, %v446
  %v461 = vmax.f32 %v433, %v447
  %v462 = vmax.f32 %v434, %v448
  %v463 = vmax.f32 %v435, %v449
  %v464 = vmax.f32 %v436, %v450
  %v465 = vmax.f32 %v437, %v451
  %v466 = vmax.f32 %v438, %v452
  %v467 = vmax.f32 %v439, %v453
  %v468 = vmax.f32 %v440, %v454
  %v469 = vmax.f32 %v441, %v455
  %v470 = vmax.f32 %v442, %v456
  %v471 = vmax.f32 %v443, %v457
  %v472 = vmax.f32 %v444, %v458
  %v473 = vmax.f32 %v445, %v459
  %v474 = vld [vmem:[%s2] sm:$0x1]
  %v476 = vperm.slane %v474, 0
  %v478 = vadd.f32 %v460, %v476
  %v479 = vadd.f32 %v461, %v476
  %v480 = vadd.f32 %v462, %v476
  %v481 = vadd.f32 %v463, %v476
  %v482 = vadd.f32 %v464, %v476
  %v483 = vadd.f32 %v465, %v476
  %v484 = vadd.f32 %v466, %v476
  %v485 = vadd.f32 %v467, %v476
  %v486 = vadd.f32 %v468, %v476
  %v487 = vadd.f32 %v469, %v476
  %v488 = vadd.f32 %v470, %v476
  %v489 = vadd.f32 %v471, %v476
  %v490 = vadd.f32 %v472, %v476
  %v491 = vadd.f32 %v473, %v476
  %v492 = vmax.f32 %v478, 0.0
  %v493 = vmax.f32 %v479, 0.0
  %v494 = vmax.f32 %v480, 0.0
  %v495 = vmax.f32 %v481, 0.0
  %v496 = vmax.f32 %v482, 0.0
  %v497 = vmax.f32 %v483, 0.0
  %v498 = vmax.f32 %v484, 0.0
  %v499 = vmax.f32 %v485, 0.0
  %v500 = vmax.f32 %v486, 0.0
  %v501 = vmax.f32 %v487, 0.0
  %v502 = vmax.f32 %v488, 0.0
  %v503 = vmax.f32 %v489, 0.0
  %v504 = vmax.f32 %v490, 0.0
  %v505 = vmax.f32 %v491, 0.0
  %506 = vst [vmem:[%s3] sm:$0xff] %v492
  %507 = vst [vmem:[%s3 + $0x8] sm:$0xff] %v493
  %508 = vst [vmem:[%s3 + $0x10] sm:$0xff] %v494
  %509 = vst [vmem:[%s3 + $0x18] sm:$0xff] %v495
  %510 = vst [vmem:[%s3 + $0x20] sm:$0xff] %v496
  %511 = vst [vmem:[%s3 + $0x28] sm:$0xff] %v497
  %512 = vst [vmem:[%s3 + $0x30] sm:$0xff] %v498
  %513 = vst [vmem:[%s3 + $0x38] sm:$0xff] %v499
  %514 = vst [vmem:[%s3 + $0x40] sm:$0xff] %v500
  %515 = vst [vmem:[%s3 + $0x48] sm:$0xff] %v501
  %516 = vst [vmem:[%s3 + $0x50] sm:$0xff] %v502
  %517 = vst [vmem:[%s3 + $0x58] sm:$0xff] %v503
  %518 = vst [vmem:[%s3 + $0x60] sm:$0xff] %v504
  %519 = vst [vmem:[%s3 + $0x68] sm:$0xff] %v505
  // Predicated region
  $region14: #{convnet_forward.1} parent=0 // pred_check
    _
  $region15: #{convnet_forward.1} parent=0 // pred_check_branch
    %521 = sbr.rel (0) target = $region17
  $region16: #{convnet_forward.1} parent=0 // pred_region
    _
  $region17: #{convnet_forward.1} parent=0 // pred_fallthru
    _
  // Predicated region
  $region18: #{convnet_forward.1} parent=0 // pred_check
    _
  $region19: #{convnet_forward.1} parent=0 // pred_check_branch
    %523 = sbr.rel (0) target = $region21
  $region20: #{convnet_forward.1} parent=0 // pred_region
    _
  $region21: #{convnet_forward.1} parent=0 // pred_fallthru
    _

</llo_original>
